<compile_context>
chip_gen: v5e
topology: v5e:2x2
jax: 0.10.0
libtpu: 0.0.40
codegen_flags: <defaults>
</compile_context>

<pallas_src>
import jax
import jax.numpy as jnp
from jax.experimental import pallas as pl
from jax.experimental.pallas import tpu as pltpu

BN_EPS = 1e-12         # nn.BatchNorm1d(hid_dim, eps=1e-12)
NORM_EPS = 1e-12       # F.normalize default eps


# ----------------------------------------------------------------------------
# Kernel
# ----------------------------------------------------------------------------
def projection_kernel(x_ref, w1_ref, gb_ref, w2_ref, o_ref):
    k = pl.program_id(1)

    @pl.when(k == 0)
    def _():
        o_ref[...] = jnp.zeros_like(o_ref)

    # ---- Linear 1 slab: X @ W1[:, slab]  (bf16 operands, f32 accumulate) ----
    # b1 is dropped: a Linear bias feeding training-mode BatchNorm is cancelled
    # exactly by the mean subtraction.
    h = jnp.dot(x_ref[...], w1_ref[...],
                preferred_element_type=jnp.float32)              # [B, th] f32

    # ---- BatchNorm1d (training mode, biased variance), two-pass stats ----
    inv_b = 1.0 / x_ref.shape[0]                                 # static
    mean = jnp.sum(h, axis=0, keepdims=True) * inv_b             # [1, th]
    c = h - mean                                                 # centered
    var = jnp.sum(c * c, axis=0, keepdims=True) * inv_b          # [1, th]
    gb = gb_ref[...]                                             # [2, th] f32
    scale = gb[0:1, :] * jax.lax.rsqrt(var + BN_EPS)             # gamma/std

    # ---- ReLU + Linear 2 partial-K accumulation into the resident output ----
    r = jnp.maximum(c * scale + gb[1:2, :], 0.0)                 # [B, th] f32
    o_ref[...] += jnp.dot(r.astype(jnp.bfloat16), w2_ref[...],
                          preferred_element_type=jnp.float32)    # [B, out_pad]


# ----------------------------------------------------------------------------
# Sizing helpers
# ----------------------------------------------------------------------------
def _vmem_capacity_bytes():
    """Physical VMEM of the local chip; conservative fallback = 64 MiB (v7x)."""
    try:
        info = pltpu.get_tpu_info()
        cap = getattr(info, "vmem_capacity_bytes", None)
        if cap:
            return int(cap)
    except Exception:
        pass
    return 64 * 1024 * 1024


def _pick_tile_hid(hid, in_dim, out_pad, batch, vmem_limit):
    """Largest multiple-of-128 divisor of hid whose double-buffered weight
    slabs fit the VMEM budget left after the B-dependent resident buffers."""
    # Fixed residents (conservatively assume double-buffering everywhere):
    fixed = 2 * (batch * in_dim * 2)        # bf16 X (constant-index input)
    fixed += 2 * (batch * out_pad * 4)      # f32 output block / accumulator
    budget = int(vmem_limit * 0.85) - fixed
    budget = max(budget, 4 * 1024 * 1024)

    def slab_bytes(t):
        # double-buffered bf16 W1/W2 slabs + f32 gamma/beta slab
        return 2 * (in_dim * t * 2 + t * out_pad * 2 + 2 * t * 4)

    if hid % 128 != 0:
        return hid  # small / irregular hidden dim: single slab along hid
    for t in range(hid, 127, -128):        # largest first (>=256 fills the MXU)
        if hid % t == 0 and slab_bytes(t) <= budget:
            return t
    return 128


# ----------------------------------------------------------------------------
# Wrapper
# ----------------------------------------------------------------------------
def prepare_params(params):
    """Pack weights ONCE (bf16 at rest, lane-dense 128-padded W2, coalesced BN
    params).  Call outside the per-step forward so the packing isn't redone."""
    w1, b1, gamma, beta, w2, b2 = params
    del b1  # cancelled by training-mode BatchNorm (mean subtraction)
    hid, out_dim = w2.shape
    out_pad = max(128, ((out_dim + 127) // 128) * 128)   # lane-dense output

    w1_bf = w1.astype(jnp.bfloat16)                                  # [in, hid]
    gb = jnp.stack([gamma, beta], axis=0).astype(jnp.float32)        # [2, hid]
    w2_pad = jnp.zeros((hid, out_pad), jnp.bfloat16).at[:, :out_dim].set(
        w2.astype(jnp.bfloat16))                                     # [hid, out_pad]
    b2 = b2.astype(jnp.float32)                                      # [out_dim]
    return (w1_bf, gb, w2_pad, b2)


def projection_forward(x, packed):
    """x: [B, in_dim] float32.  packed: output of prepare_params().
    Returns [B, hid_dim // 2] float32."""
    w1_bf, gb, w2_pad, b2 = packed
    B, in_dim = x.shape
    hid, out_pad = w2_pad.shape
    out_dim = b2.shape[0]

    # VMEM budget per chip generation (v7x 64 MiB, v5e/v6e 128 MiB physical).
    vmem_cap = _vmem_capacity_bytes()
    vmem_limit = min(int(vmem_cap * 0.75), 112 * 1024 * 1024)
    vmem_limit = max(vmem_limit, 32 * 1024 * 1024)

    tile_hid = _pick_tile_hid(hid, in_dim, out_pad, B, vmem_limit)
    n_tiles = hid // tile_hid
    n_par = 2 if (n_tiles % 2 == 0) else 1   # v7x: one hid-half per TensorCore
    n_k = n_tiles // n_par

    # Cast X to bf16 once (halves resident-X VMEM + DMA; kills per-step cast).
    x_bf = x.astype(jnp.bfloat16)

    partials = pl.pallas_call(
        projection_kernel,
        out_shape=jax.ShapeDtypeStruct((n_par, B, out_pad), jnp.float32),
        grid_spec=pltpu.PrefetchScalarGridSpec(
            num_scalar_prefetch=0,
            grid=(n_par, n_k),
            in_specs=[
                pl.BlockSpec((B, in_dim), lambda p, k: (0, 0)),          # X (resident)
                pl.BlockSpec((in_dim, tile_hid),
                             lambda p, k: (0, p * n_k + k)),             # W1 slab
                pl.BlockSpec((2, tile_hid),
                             lambda p, k: (0, p * n_k + k)),             # gamma/beta
                pl.BlockSpec((tile_hid, out_pad),
                             lambda p, k: (p * n_k + k, 0)),             # W2 slab
            ],
            out_specs=pl.BlockSpec((None, B, out_pad),
                                   lambda p, k: (p, 0, 0)),              # partial acc
        ),
        compiler_params=pltpu.CompilerParams(
            dimension_semantics=("parallel", "arbitrary"),
            vmem_limit_bytes=vmem_limit,
        ),
    )(x_bf, w1_bf, gb, w2_pad)

    # Tiny fused XLA epilogue: combine partials, bias, L2-normalize (dim=1).
    y = jnp.sum(partials, axis=0)[:, :out_dim] + b2
    inv_norm = jax.lax.rsqrt(jnp.maximum(jnp.sum(y * y, axis=1, keepdims=True),
                                         NORM_EPS * NORM_EPS))
    return y * inv_norm


# ----------------------------------------------------------------------------
# Init + references
# ----------------------------------------------------------------------------
def init_params(key, in_dim, hid_dim):
    """Deterministic init mimicking PyTorch defaults (U(-1/sqrt(fan_in), +))."""
    k1, k2, k3, k4 = jax.random.split(key, 4)
    bound1 = 1.0 / jnp.sqrt(in_dim)
    bound2 = 1.0 / jnp.sqrt(hid_dim)
    # stored transposed relative to PyTorch: [in_features, out_features]
    w1 = jax.random.uniform(k1, (in_dim, hid_dim), jnp.float32, -bound1, bound1)
    b1 = jax.random.uniform(k2, (hid_dim,), jnp.float32, -bound1, bound1)
    gamma = jnp.ones((hid_dim,), jnp.float32)   # BatchNorm1d weight
    beta = jnp.zeros((hid_dim,), jnp.float32)   # BatchNorm1d bias
    w2 = jax.random.uniform(k3, (hid_dim, hid_dim // 2), jnp.float32, -bound2, bound2)
    b2 = jax.random.uniform(k4, (hid_dim // 2,), jnp.float32, -bound2, bound2)
    return (w1, b1, gamma, beta, w2, b2)


def reference_forward_matched(x, params):
    """Pure-JAX reference mirroring the kernel's bf16-matmul / f32-accum math."""
    w1, b1, gamma, beta, w2, b2 = params
    del b1  # cancelled by training-mode BN
    h = jnp.dot(x.astype(jnp.bfloat16), w1.astype(jnp.bfloat16),
                preferred_element_type=jnp.float32)
    mean = jnp.mean(h, axis=0, keepdims=True)
    c = h - mean
    var = jnp.mean(c * c, axis=0, keepdims=True)
    r = jnp.maximum(c * (gamma * jax.lax.rsqrt(var + BN_EPS)) + beta, 0.0)
    y = jnp.dot(r.astype(jnp.bfloat16), w2.astype(jnp.bfloat16),
                preferred_element_type=jnp.float32) + b2
    n = jnp.maximum(jnp.linalg.norm(y, axis=1, keepdims=True), NORM_EPS)
    return y / n


def reference_forward_f32(x, params):
    """Full-f32 reference with the original PyTorch (training-mode BN) semantics."""
    w1, b1, gamma, beta, w2, b2 = params
    h = x @ w1 + b1
    mean = jnp.mean(h, axis=0, keepdims=True)
    var = jnp.mean((h - mean) ** 2, axis=0, keepdims=True)
    h = (h - mean) / jnp.sqrt(var + BN_EPS) * gamma + beta
    h = jnp.maximum(h, 0.0)
    y = h @ w2 + b2
    n = jnp.maximum(jnp.linalg.norm(y, axis=1, keepdims=True), NORM_EPS)
    return y / n


# ----------------------------------------------------------------------------
if __name__ == "__main__":
    B, IN_DIM, HID_DIM = 8, 32, 32

    key = jax.random.PRNGKey(0)
    kx, kp = jax.random.split(key)
    x = jax.random.normal(kx, (B, IN_DIM), dtype=jnp.float32)
    params = init_params(kp, IN_DIM, HID_DIM)

    packed = prepare_params(params)                    # pack weights once
    fwd = jax.jit(projection_forward)

    out = fwd(x, packed)
    out = jax.block_until_ready(out)
    assert out.shape == (B, HID_DIM // 2), out.shape

    # Tight check vs. a reference using the same bf16-operand / f32-accum math.
    ref_m = reference_forward_matched(x, params)
    err_m = float(jnp.max(jnp.abs(out - ref_m)))
    assert jnp.allclose(out, ref_m, atol=2e-3, rtol=2e-3), err_m

    # Looser check vs. the full-f32 PyTorch-semantics reference (bf16 matmul noise).
    ref_f = reference_forward_f32(x, params)
    err_f = float(jnp.max(jnp.abs(out - ref_f)))
    assert jnp.allclose(out, ref_f, atol=5e-2, rtol=5e-2), err_f

    print("KERNEL_OK")
</pallas_src>

<mosaic_0001>
module attributes {stable_mosaic.version = 11 : i64} {
  func.func @projection_kernel(%arg0: i32, %arg1: i32, %arg2: memref<8x32xbf16, #tpu.memory_space<vmem>>, %arg3: memref<32x32xbf16, #tpu.memory_space<vmem>>, %arg4: memref<2x32xf32, #tpu.memory_space<vmem>>, %arg5: memref<32x128xbf16, #tpu.memory_space<vmem>>, %arg6: memref<1x8x128xf32, #tpu.memory_space<vmem>>) attributes {dimension_semantics = [#tpu.dimension_semantics<parallel>, #tpu.dimension_semantics<arbitrary>], iteration_bounds = array<i64: 1, 1>, scalar_prefetch = 0 : i64, scratch_operands = 0 : i64, tpu.core_type = #tpu.core_type<tc>, window_params = [{pipeline_mode = #tpu.pipeline_mode<synchronous>, transform_indices = @transform_0, window_bounds = array<i64: 8, 32>}, {transform_indices = @transform_1, window_bounds = array<i64: 32, 32>}, {transform_indices = @transform_2, window_bounds = array<i64: 2, 32>}, {transform_indices = @transform_3, window_bounds = array<i64: 32, 128>}, {transform_indices = @transform_4, window_bounds = array<i64: 1, 8, 128>}]} {
    %c0_i32 = arith.constant 0 : i32
    %0 = arith.cmpi eq, %arg1, %c0_i32 : i32
    %1 = arith.extui %0 : i1 to i32
    %c0_i32_0 = arith.constant 0 : i32
    %2 = arith.cmpi ne, %1, %c0_i32_0 : i32
    scf.if %2 {
      %cst_21 = arith.constant 0.000000e+00 : f32
      %39 = vector.broadcast %cst_21 : f32 to vector<8x128xf32>
      %c0_22 = arith.constant 0 : index
      %c0_23 = arith.constant 0 : index
      %c0_24 = arith.constant 0 : index
      %40 = vector.load %arg6[%c0_22, %c0_23, %c0_24] : memref<1x8x128xf32, #tpu.memory_space<vmem>>, vector<1x8x128xf32>
      %41 = vector.shape_cast %40 : vector<1x8x128xf32> to vector<8x128xf32>
      %42 = vector.shape_cast %39 : vector<8x128xf32> to vector<1x8x128xf32>
      tpu.vector_store %arg6[%c0_22, %c0_23, %c0_24], %42 {strides = array<i32>} : memref<1x8x128xf32, #tpu.memory_space<vmem>>, vector<1x8x128xf32>,
    } else {
    }
    %c0 = arith.constant 0 : index
    %c0_1 = arith.constant 0 : index
    %3 = vector.load %arg2[%c0, %c0_1] : memref<8x32xbf16, #tpu.memory_space<vmem>>, vector<8x32xbf16>
    %c0_2 = arith.constant 0 : index
    %c0_3 = arith.constant 0 : index
    %4 = vector.load %arg3[%c0_2, %c0_3] : memref<32x32xbf16, #tpu.memory_space<vmem>>, vector<32x32xbf16>
    %cst = arith.constant dense<0.000000e+00> : vector<8x32xf32>
    %5 = tpu.matmul %3, %4, %cst {dimension_numbers = #tpu.dot_dimension_numbers<[1], [0], [0], [1], [0, 0, 1, 1], [], []>} : vector<8x32xbf16>, vector<32x32xbf16>, vector<8x32xf32> -> vector<8x32xf32>
    %cst_4 = arith.constant dense<0.000000e+00> : vector<32xf32>
    %6 = vector.multi_reduction <add>, %5, %cst_4 [0] : vector<8x32xf32> to vector<32xf32>
    %7 = vector.shape_cast %6 : vector<32xf32> to vector<1x32xf32>
    %cst_5 = arith.constant 1.250000e-01 : f32
    %8 = vector.broadcast %cst_5 : f32 to vector<1x32xf32>
    %9 = arith.mulf %7, %8 : vector<1x32xf32>
    %10 = vector.broadcast %9 : vector<1x32xf32> to vector<8x32xf32>
    %11 = arith.subf %5, %10 : vector<8x32xf32>
    %12 = arith.mulf %11, %11 : vector<8x32xf32>
    %cst_6 = arith.constant dense<0.000000e+00> : vector<32xf32>
    %13 = vector.multi_reduction <add>, %12, %cst_6 [0] : vector<8x32xf32> to vector<32xf32>
    %14 = vector.shape_cast %13 : vector<32xf32> to vector<1x32xf32>
    %cst_7 = arith.constant 1.250000e-01 : f32
    %15 = vector.broadcast %cst_7 : f32 to vector<1x32xf32>
    %16 = arith.mulf %14, %15 : vector<1x32xf32>
    %c0_8 = arith.constant 0 : index
    %c0_9 = arith.constant 0 : index
    %17 = vector.load %arg4[%c0_8, %c0_9] : memref<2x32xf32, #tpu.memory_space<vmem>>, vector<2x32xf32>
    %18 = vector.extract_strided_slice %17 {offsets = [0, 0], sizes = [1, 32], strides = [1, 1]} : vector<2x32xf32> to vector<1x32xf32>
    %cst_10 = arith.constant 9.99999996E-13 : f32
    %19 = vector.broadcast %cst_10 : f32 to vector<1x32xf32>
    %20 = arith.addf %16, %19 : vector<1x32xf32>
    %21 = math.rsqrt %20 : vector<1x32xf32>
    %22 = arith.mulf %18, %21 : vector<1x32xf32>
    %23 = vector.broadcast %22 : vector<1x32xf32> to vector<8x32xf32>
    %24 = arith.mulf %11, %23 : vector<8x32xf32>
    %25 = vector.extract_strided_slice %17 {offsets = [1, 0], sizes = [1, 32], strides = [1, 1]} : vector<2x32xf32> to vector<1x32xf32>
    %26 = vector.broadcast %25 : vector<1x32xf32> to vector<8x32xf32>
    %27 = arith.addf %24, %26 : vector<8x32xf32>
    %cst_11 = arith.constant 0.000000e+00 : f32
    %28 = vector.broadcast %cst_11 : f32 to vector<8x32xf32>
    %29 = arith.maximumf %27, %28 : vector<8x32xf32>
    %c0_12 = arith.constant 0 : index
    %c0_13 = arith.constant 0 : index
    %c0_14 = arith.constant 0 : index
    %30 = vector.load %arg6[%c0_12, %c0_13, %c0_14] : memref<1x8x128xf32, #tpu.memory_space<vmem>>, vector<1x8x128xf32>
    %31 = vector.shape_cast %30 : vector<1x8x128xf32> to vector<8x128xf32>
    %32 = arith.truncf %29 : vector<8x32xf32> to vector<8x32xbf16>
    %c0_15 = arith.constant 0 : index
    %c0_16 = arith.constant 0 : index
    %33 = vector.load %arg5[%c0_15, %c0_16] : memref<32x128xbf16, #tpu.memory_space<vmem>>, vector<32x128xbf16>
    %cst_17 = arith.constant dense<0.000000e+00> : vector<8x128xf32>
    %34 = tpu.matmul %32, %33, %cst_17 {dimension_numbers = #tpu.dot_dimension_numbers<[1], [0], [0], [1], [0, 0, 1, 1], [], []>} : vector<8x32xbf16>, vector<32x128xbf16>, vector<8x128xf32> -> vector<8x128xf32>
    %35 = arith.addf %31, %34 : vector<8x128xf32>
    %c0_18 = arith.constant 0 : index
    %c0_19 = arith.constant 0 : index
    %c0_20 = arith.constant 0 : index
    %36 = vector.load %arg6[%c0_18, %c0_19, %c0_20] : memref<1x8x128xf32, #tpu.memory_space<vmem>>, vector<1x8x128xf32>
    %37 = vector.shape_cast %36 : vector<1x8x128xf32> to vector<8x128xf32>
    %38 = vector.shape_cast %35 : vector<8x128xf32> to vector<1x8x128xf32>
    tpu.vector_store %arg6[%c0_18, %c0_19, %c0_20], %38 {strides = array<i32>} : memref<1x8x128xf32, #tpu.memory_space<vmem>>, vector<1x8x128xf32>,
    return
  }
  func.func @transform_0(%arg0: i32, %arg1: i32) -> (i32, i32) {
    %c0_i32 = arith.constant 0 : i32
    %c0_i32_0 = arith.constant 0 : i32
    %c0_i32_1 = arith.constant 0 : i32
    return %c0_i32, %c0_i32_0 : i32, i32
  }
  func.func @transform_1(%arg0: i32, %arg1: i32) -> (i32, i32) {
    %c1_i32 = arith.constant 1 : i32
    %0 = arith.muli %arg0, %c1_i32 : i32
    %1 = arith.addi %0, %arg1 : i32
    %c0_i32 = arith.constant 0 : i32
    %c0_i32_0 = arith.constant 0 : i32
    return %c0_i32, %1 : i32, i32
  }
  func.func @transform_2(%arg0: i32, %arg1: i32) -> (i32, i32) {
    %c1_i32 = arith.constant 1 : i32
    %0 = arith.muli %arg0, %c1_i32 : i32
    %1 = arith.addi %0, %arg1 : i32
    %c0_i32 = arith.constant 0 : i32
    %c0_i32_0 = arith.constant 0 : i32
    return %c0_i32, %1 : i32, i32
  }
  func.func @transform_3(%arg0: i32, %arg1: i32) -> (i32, i32) {
    %c1_i32 = arith.constant 1 : i32
    %0 = arith.muli %arg0, %c1_i32 : i32
    %1 = arith.addi %0, %arg1 : i32
    %c0_i32 = arith.constant 0 : i32
    %c0_i32_0 = arith.constant 0 : i32
    return %1, %c0_i32 : i32, i32
  }
  func.func @transform_4(%arg0: i32, %arg1: i32) -> (i32, i32, i32) {
    %c0_i32 = arith.constant 0 : i32
    %c0_i32_0 = arith.constant 0 : i32
    %c0_i32_1 = arith.constant 0 : i32
    return %arg0, %c0_i32, %c0_i32_0 : i32, i32, i32
  }
}

</mosaic_0001>

<llo_original>
// kernel: projection_forward.1
$region0: #{projection_forward.1}
  #allocation0 [shape = 'u32[]', space=smem, size = 0x4, offset = 0x4, fixed_abs, tag = 'smem constant byte address 0x4 - core index']
  #allocation1 [shape = 'u32[72,128]{1,0:T(1,128)}', space=vmem, size = 0x9000, scoped, tag = 'internal scratch']
  %s0 = inlined_call_operand.vmem [shape: bf16[8,32], index: 0, kind: input, shape index: {}]
  %s1 = inlined_call_operand.hbm [shape: bf16[32,32], index: 1, kind: input, shape index: {}]
  %s2 = inlined_call_operand.vmem [shape: f32[2,32], index: 2, kind: input, shape index: {}]
  %s3 = inlined_call_operand.hbm [shape: bf16[32,128], index: 3, kind: input, shape index: {}]
  %s4 = inlined_call_operand.vmem [shape: f32[1,8,128], index: 4, kind: output, shape index: {}]
  %s5 = sld [smem:[#allocation0]]
  $region38: #{projection_forward.1} parent=0
    _
  %s7 = ssub.s32 1, %s5
  %s8 = scalar_select 0, %s7, %s5
  $region1: #{projection_forward.1} parent=0
    #allocation2 [shape = 'u8[8192]{0}', space=vmem, size = 0x2000, scoped, tag = 'input window, operand 1, single buffered']
    #allocation3 [shape = 's32[1]{0}', space=sflag, size = 0x4, scoped, tag = 'scoped memory for projection_forward.1']
    #allocation4 [shape = 'u8[8192]{0}', space=vmem, size = 0x2000, scoped, tag = 'input window, operand 3, single buffered']
    #allocation5 [shape = 's32[1]{0}', space=sflag, size = 0x4, scoped, tag = 'scoped memory for projection_forward.1']
    %9 = vsyncpa [#allocation3], 0
    %10 = vsyncpa [#allocation5], 0
    // Predicated region
    $region2: #{projection_forward.1} parent=1 // pred_check
      _
    $region3: #{projection_forward.1} parent=1 // pred_check_branch
      %12 = sbr.rel (0) target = $region5
    $region4: #{projection_forward.1} parent=1 // pred_region
      _
    $region5: #{projection_forward.1} parent=1 // pred_fallthru
      _
    // Predicated region
    $region6: #{projection_forward.1} parent=1 // pred_check
      _
    $region7: #{projection_forward.1} parent=1 // pred_check_branch
      %14 = sbr.rel (0) target = $region9
    $region8: #{projection_forward.1} parent=1 // pred_region
      %s15 = sadd.s32 0, 0
      %17 = vsyncadd [#allocation3], 0
      %s18 = smul.addr %s15, 4
      %s19 = scalar_lea.hbm %s1, %s18
      %s20 = sshll.u32 %s19, 4
      %s21 = int_to_ptr.hbm [resolvable:$true] %s20
      %s22 = sshll.u32 [#allocation2], 4
      %s23 = int_to_ptr.vmem [resolvable:$true] %s22
      %28 = dma.hbm_to_vmem [thread:$0]  %s21, 256, %s23, [#allocation3], 64, 64, 4
    $region9: #{projection_forward.1} parent=1 // pred_fallthru
      _
    // Predicated region
    $region10: #{projection_forward.1} parent=1 // pred_check
      _
    $region11: #{projection_forward.1} parent=1 // pred_check_branch
      %30 = sbr.rel (0) target = $region13
    $region12: #{projection_forward.1} parent=1 // pred_region
      %s31 = sadd.s32 0, 0
      %p32 = scmp.lt.s32.totalorder %s31, 0
      %s33 = scalar_select %p32, %s31, 0
      %s34 = smul.addr %s33, 2
      %s35 = scalar_lea.vmem %s2, %s34
      %s36 = sadd.s32 0, 0
    $region13: #{projection_forward.1} parent=1 // pred_fallthru
      _
    // Predicated region
    $region14: #{projection_forward.1} parent=1 // pred_check
      _
    $region15: #{projection_forward.1} parent=1 // pred_check_branch
      %38 = sbr.rel (0) target = $region17
    $region16: #{projection_forward.1} parent=1 // pred_region
      %s39 = sadd.s32 0, 0
      %s40 = smul.u32 4, %s39
      %42 = vsyncadd [#allocation5], 0
      %s43 = smul.addr %s40, 4
      %s44 = scalar_lea.hbm %s3, %s43
      %s45 = sshll.u32 %s44, 4
      %s46 = int_to_ptr.hbm [resolvable:$true] %s45
      %s47 = sshll.u32 [#allocation4], 4
      %s48 = int_to_ptr.vmem [resolvable:$true] %s47
      %53 = dma.hbm_to_vmem [thread:$0]  %s46, 256, %s48, [#allocation5], 64, 64, 4
    $region17: #{projection_forward.1} parent=1 // pred_fallthru
      _
    // Predicated region
    $region18: #{projection_forward.1} parent=1 // pred_check
      _
    $region19: #{projection_forward.1} parent=1 // pred_check_branch
      %55 = sbr.rel (0) target = $region21
    $region20: #{projection_forward.1} parent=1 // pred_region
      %57 = dma.done [#allocation3], 256
    $region21: #{projection_forward.1} parent=1 // pred_fallthru
      _
    // Predicated region
    $region22: #{projection_forward.1} parent=1 // pred_check
      _
    $region23: #{projection_forward.1} parent=1 // pred_check_branch
      %59 = sbr.rel (0) target = $region25
    $region24: #{projection_forward.1} parent=1 // pred_region
      %61 = dma.done [#allocation5], 256
    $region25: #{projection_forward.1} parent=1 // pred_fallthru
      _
    %s62 = sadd.s32 0, 0
    %p63 = scmp.lt.s32.totalorder %s62, 0
    %s64 = scalar_select %p63, %s62, 0
    %s65 = smul.addr %s64, 2
    %s66 = scalar_lea.vmem %s2, %s65
    %s67 = sadd.s32 0, 0
    %s68 = sadd.s32 0, 0
    %p69 = scmp.lt.s32.totalorder %s68, 0
    %s70 = scalar_select %p69, %s68, 0
    %s71 = smul.addr %s70, 2
    %s72 = scalar_lea.vmem %s2, %s71
    %s73 = sadd.s32 0, 0
    %s74 = sadd.s32 0, 0
    %s75 = smul.u32 4, %s74
    %p77 = scmp.eq.s32.totalorder 0, 0
    // Predicated region
    $region26: #{projection_forward.1} parent=1 // pred_check
      %p78 = pneg %p77
    $region27: #{projection_forward.1} parent=1 // pred_check_branch
      %80 = sbr.rel (%p78) target = $region29
    $region28: #{projection_forward.1} parent=1 // pred_region
      %81 = vst [vmem:[%s4] sm:$0xff] 0.0
    $region29: #{projection_forward.1} parent=1 // pred_fallthru
      _
    %v82 = vld [vmem:[%s0] sm:$0xf]
    %v83 = vld [vmem:[#allocation2] sm:$0xf]
    %v84 = vld [vmem:[#allocation2 + $0x4] sm:$0xf]
    %v85 = vld [vmem:[#allocation2 + $0x8] sm:$0xf]
    %v86 = vld [vmem:[#allocation2 + $0xc] sm:$0xf]
    %v91 = vunpack.c.l.b16 %v83
    %v92 = vunpack.c.l.b16 %v84
    %v93 = vunpack.c.l.b16 %v85
    %v94 = vunpack.c.l.b16 %v86
    %v95 = vpack.c.b16 %v92, %v91
    %v96 = vpack.c.b16 %v94, %v93
    %vm99 = vcmask 261120
    %v101 = vsel %vm99, %v82, 0
    %103 = vmatpush.bf16.msra.mxu0 0
    %104 = vmatpush.bf16.msra.mxu0 0
    %105 = vmatpush.bf16.msra.mxu0 0
    %106 = vmatpush.bf16.msra.mxu0 0
    %107 = vmatpush.bf16.msra.mxu0 0
    %108 = vmatpush.bf16.msra.mxu0 0
    %109 = vmatpush.bf16.msra.mxu0 %v96
    %110 = vmatpush.bf16.msra.mxu0 %v95
    %111 = vmatmul.bf16.gmra.mxu0 %v101
    %v112 = vpop.f32.mrf.mxu0
    %v113 = vadd.f32 0.0, %v112
    %v114 = vpop.f32.mrf.mxu0
    %115 = vdwg.mxu0
    %v116 = vsel %vm99, %v113, 0.0
    %v117 = vrot.slane %v116, 4
    %v118 = vadd.f32 %v116, %v117
    %v119 = vrot.slane %v118, 2
    %v120 = vadd.f32 %v118, %v119
    %v121 = vrot.slane %v120, 1
    %v122 = vadd.f32 %v120, %v121
    %v123 = vmul.f32 %v122, 0.125
    %v124 = vsub.f32 %v113, %v123
    %v125 = vmul.f32 %v124, %v124
    %v126 = vsel %vm99, %v125, 0.0
    %v127 = vrot.slane %v126, 4
    %v128 = vadd.f32 %v126, %v127
    %v129 = vrot.slane %v128, 2
    %v130 = vadd.f32 %v128, %v129
    %v131 = vrot.slane %v130, 1
    %v132 = vadd.f32 %v130, %v131
    %v133 = vmul.f32 %v132, 0.125
    %v134 = vld [vmem:[%s72] sm:$0x3]
    %v135 = vadd.f32 %v133, 1e-12
    %v136 = vrsqrt.pop %v135
    %v137 = vmul.f32 %v136, %v135
    %v138 = vmul.f32 %v137, %v136
    %v139 = vmul.f32 0.5, %v138
    %v140 = vsub.f32 1.5, %v139
    %v141 = vmul.f32 %v136, %v140
    %vm142 = vweird.f32 %v135
    %vm143 = vweird.f32 %v136
    %vm144 = vmor %vm142, %vm143
    %v145 = vsel %vm144, %v136, %v141
    %v146 = vmul.f32 %v134, %v145
    %v147 = vperm.slane %v146, 0
    %v148 = vmul.f32 %v124, %v147
    %v149 = vperm.slane %v134, 1
    %v150 = vadd.f32 %v148, %v149
    %v151 = vmax.f32 %v150, 0.0
    %v152 = vld [vmem:[%s4] sm:$0xff]
    %v153 = vpack.c.bf16 %v151, %v151
    %v154 = vld [vmem:[#allocation4] sm:$0xf]
    %v155 = vld [vmem:[#allocation4 + $0x4] sm:$0xf]
    %v156 = vld [vmem:[#allocation4 + $0x8] sm:$0xf]
    %v157 = vld [vmem:[#allocation4 + $0xc] sm:$0xf]
    %v162 = vunpack.c.l.b16 %v154
    %v163 = vunpack.c.l.b16 %v155
    %v164 = vunpack.c.l.b16 %v156
    %v165 = vunpack.c.l.b16 %v157
    %v166 = vpack.c.b16 %v163, %v162
    %v167 = vpack.c.b16 %v165, %v164
    %v171 = vsel %vm99, %v153, 0
    %173 = vmatpush.bf16.msra.mxu0 0
    %174 = vmatpush.bf16.msra.mxu0 0
    %175 = vmatpush.bf16.msra.mxu0 0
    %176 = vmatpush.bf16.msra.mxu0 0
    %177 = vmatpush.bf16.msra.mxu0 0
    %178 = vmatpush.bf16.msra.mxu0 0
    %179 = vmatpush.bf16.msra.mxu0 %v167
    %180 = vmatpush.bf16.msra.mxu0 %v166
    %181 = vmatmul.bf16.gmra.mxu0 %v171
    %v182 = vpop.f32.mrf.mxu0
    %v183 = vadd.f32 0.0, %v182
    %v184 = vpop.f32.mrf.mxu0
    %185 = vdwg.mxu0
    %v186 = vadd.f32 %v152, %v183
    %187 = vst [vmem:[%s4] sm:$0xff] %v186
    // Predicated region
    $region30: #{projection_forward.1} parent=1 // pred_check
      _
    $region31: #{projection_forward.1} parent=1 // pred_check_branch
      %189 = sbr.rel (0) target = $region33
    $region32: #{projection_forward.1} parent=1 // pred_region
      _
    $region33: #{projection_forward.1} parent=1 // pred_fallthru
      _
    // Predicated region
    $region34: #{projection_forward.1} parent=1 // pred_check
      _
    $region35: #{projection_forward.1} parent=1 // pred_check_branch
      %191 = sbr.rel (0) target = $region37
    $region36: #{projection_forward.1} parent=1 // pred_region
      _
    $region37: #{projection_forward.1} parent=1 // pred_fallthru
      _
    %192 = vsyncpa [#allocation3], 1
    %193 = vsyncpa [#allocation5], 1

</llo_original>
